<compile_context>
chip_gen: v7x
topology: tpu7x:2x2x1
jax: 0.10.0
libtpu: 0.0.40
codegen_flags: <defaults>
</compile_context>

<pallas_src>
import jax
import jax.numpy as jnp
import numpy as np
from jax.experimental import pallas as pl
from jax.experimental.pallas import tpu as pltpu

KERNEL = 3
STRIDE = 3
DILATION = 2


def _pool_out_size(length, k=KERNEL, s=STRIDE, d=DILATION, ceil_mode=True):
    """PyTorch pooling_output_shape with padding=0."""
    num = length - d * (k - 1) - 1 + (s - 1 if ceil_mode else 0)
    o = num // s + 1
    if ceil_mode and (o - 1) * s >= length:
        o -= 1
    return o


def _maxpool_kernel(x_ref, o_ref):
    # x_ref block: (OH + 1, STRIDE, OW + 1, STRIDE, Gt, L)  padded, channels-
    #              last; padded entries hold -inf / dtype-min so they never win.
    # o_ref block: (OH, OW, Gt, L)
    oh = o_ref.shape[0]
    ow = o_ref.shape[1]
    out = None
    for kh in range(KERNEL):
        # tap row 3*o + kh*DILATION  ==  reshaped index (o + h0, hi)
        h0, hi = divmod(kh * DILATION, STRIDE)
        for kw in range(KERNEL):
            w0, wi = divmod(kw * DILATION, STRIDE)
            tap = x_ref[h0:h0 + oh, hi, w0:w0 + ow, wi, :, :]   # (OH, OW, Gt, L)
            out = tap if out is None else jnp.maximum(out, tap)
    o_ref[...] = out


def maxpool2d_mynet2(x, *, block_vmem_budget=24 * 1024 * 1024):
    """Forward pass of MyNet2 (dilated, ceil_mode max-pool) on NCHW input."""
    N, C, H, W = x.shape
    P = N * C
    OH = _pool_out_size(H)
    OW = _pool_out_size(W)

    # ---- lane-dense relayout: planes -> trailing (sublane, lane) dims -------
    if P % 128 == 0:
        L = 128                 # full 128-lane utilisation
    else:
        L = P                   # small plane count: full-extent lane dim
    G = P // L

    if jnp.issubdtype(x.dtype, jnp.floating):
        pad_val = -float("inf")
    else:
        pad_val = int(jnp.iinfo(x.dtype).min)

    # Pad so every dilated tap lands inside the array; ceil_mode partial
    # windows see -inf padding.  (HP >= H always holds for ceil_mode output.)
    HP = STRIDE * (OH + 1)
    WP = STRIDE * (OW + 1)
    xc = jnp.transpose(x.reshape(P, H, W), (1, 2, 0))              # (H, W, P)
    xc = jnp.pad(xc, ((0, HP - H), (0, WP - W), (0, 0)),
                 constant_values=pad_val)
    xc = xc.reshape(OH + 1, STRIDE, OW + 1, STRIDE, G, L)

    # ---- channel-group tiling: largest Gt (divisor of G, multiple of 8 or
    # full extent) whose double-buffered in+out blocks fit the VMEM budget ----
    esize = jnp.dtype(x.dtype).itemsize
    per_group = 2 * (HP * WP + OH * OW) * L * esize
    gt = G
    if gt * per_group > block_vmem_budget and G % 8 == 0:
        gt = 8
        while (gt * 2 <= G and G % (gt * 2) == 0
               and (gt * 2) * per_group <= block_vmem_budget):
            gt *= 2
    grid = (G // gt,)

    out = pl.pallas_call(
        _maxpool_kernel,
        out_shape=jax.ShapeDtypeStruct((OH, OW, G, L), x.dtype),
        grid=grid,
        in_specs=[pl.BlockSpec((OH + 1, STRIDE, OW + 1, STRIDE, gt, L),
                               lambda g: (0, 0, 0, 0, g, 0))],
        out_specs=pl.BlockSpec((OH, OW, gt, L),
                               lambda g: (0, 0, g, 0)),
        compiler_params=pltpu.CompilerParams(
            dimension_semantics=("parallel",),
            vmem_limit_bytes=48 * 1024 * 1024),
        cost_estimate=pl.CostEstimate(
            flops=(KERNEL * KERNEL - 1) * P * OH * OW,
            transcendentals=0,
            bytes_accessed=(HP * WP + OH * OW) * P * esize),
    )(xc)

    # ---- back to NCHW --------------------------------------------------------
    out = jnp.transpose(out.reshape(OH, OW, P), (2, 0, 1))
    return out.reshape(N, C, OH, OW)


def _ref_maxpool_numpy(x):
    """Pure-numpy reference with exact PyTorch MaxPool2d semantics."""
    x = np.asarray(x, dtype=np.float64)
    N, C, H, W = x.shape
    OH = _pool_out_size(H)
    OW = _pool_out_size(W)
    out = np.full((N, C, OH, OW), -np.inf, dtype=np.float64)
    for oh in range(OH):
        for ow in range(OW):
            for kh in range(KERNEL):
                for kw in range(KERNEL):
                    h = oh * STRIDE + kh * DILATION
                    w = ow * STRIDE + kw * DILATION
                    if h < H and w < W:
                        out[:, :, oh, ow] = np.maximum(out[:, :, oh, ow],
                                                       x[:, :, h, w])
    return out.astype(np.float32)


if __name__ == "__main__":
    key = jax.random.PRNGKey(0)

    # batch=2, channels=4, spatial=16 -> output spatial 5 (ceil_mode matters:
    # floor mode would give 4).
    x = jax.random.normal(key, (2, 4, 16, 16), dtype=jnp.float32)
    y = jax.block_until_ready(maxpool2d_mynet2(x))
    assert y.shape == (2, 4, 5, 5), y.shape
    np.testing.assert_allclose(np.asarray(y), _ref_maxpool_numpy(np.asarray(x)),
                               rtol=0, atol=0)

    # second case: 128 planes exercises the full-128-lane layout and uneven
    # ceil_mode padding on both spatial axes.
    x2 = jax.random.normal(jax.random.PRNGKey(0), (2, 64, 15, 17),
                           dtype=jnp.float32)
    y2 = jax.block_until_ready(maxpool2d_mynet2(x2))
    assert y2.shape == (2, 64, 5, 5), y2.shape
    np.testing.assert_allclose(np.asarray(y2),
                               _ref_maxpool_numpy(np.asarray(x2)),
                               rtol=0, atol=0)

    print("KERNEL_OK")
</pallas_src>

<mosaic_0001>
module attributes {stable_mosaic.version = 11 : i64} {
  func.func @_maxpool_kernel(%arg0: i32, %arg1: memref<6x3x6x3x1x8xf32, #tpu.memory_space<vmem>>, %arg2: memref<5x5x1x8xf32, #tpu.memory_space<vmem>>) attributes {dimension_semantics = [#tpu.dimension_semantics<parallel>], iteration_bounds = array<i64: 1>, scalar_prefetch = 0 : i64, scratch_operands = 0 : i64, tpu.core_type = #tpu.core_type<tc>, window_params = [{transform_indices = @transform_0, window_bounds = array<i64: 6, 3, 6, 3, 1, 8>}, {transform_indices = @transform_1, window_bounds = array<i64: 5, 5, 1, 8>}]} {
    %c0 = arith.constant 0 : index
    %c0_0 = arith.constant 0 : index
    %c0_1 = arith.constant 0 : index
    %c0_2 = arith.constant 0 : index
    %c0_3 = arith.constant 0 : index
    %c0_4 = arith.constant 0 : index
    %0 = vector.load %arg1[%c0, %c0_0, %c0_1, %c0_2, %c0_3, %c0_4] : memref<6x3x6x3x1x8xf32, #tpu.memory_space<vmem>>, vector<5x1x5x1x1x8xf32>
    %1 = vector.shape_cast %0 : vector<5x1x5x1x1x8xf32> to vector<5x5x1x8xf32>
    %c0_5 = arith.constant 0 : index
    %c0_6 = arith.constant 0 : index
    %c0_7 = arith.constant 0 : index
    %c2 = arith.constant 2 : index
    %c0_8 = arith.constant 0 : index
    %c0_9 = arith.constant 0 : index
    %2 = vector.load %arg1[%c0_5, %c0_6, %c0_7, %c2, %c0_8, %c0_9] : memref<6x3x6x3x1x8xf32, #tpu.memory_space<vmem>>, vector<5x1x5x1x1x8xf32>
    %3 = vector.shape_cast %2 : vector<5x1x5x1x1x8xf32> to vector<5x5x1x8xf32>
    %4 = arith.maximumf %1, %3 : vector<5x5x1x8xf32>
    %c0_10 = arith.constant 0 : index
    %c0_11 = arith.constant 0 : index
    %c1 = arith.constant 1 : index
    %c1_12 = arith.constant 1 : index
    %c0_13 = arith.constant 0 : index
    %c0_14 = arith.constant 0 : index
    %5 = vector.load %arg1[%c0_10, %c0_11, %c1, %c1_12, %c0_13, %c0_14] : memref<6x3x6x3x1x8xf32, #tpu.memory_space<vmem>>, vector<5x1x5x1x1x8xf32>
    %6 = vector.shape_cast %5 : vector<5x1x5x1x1x8xf32> to vector<5x5x1x8xf32>
    %7 = arith.maximumf %4, %6 : vector<5x5x1x8xf32>
    %c0_15 = arith.constant 0 : index
    %c2_16 = arith.constant 2 : index
    %c0_17 = arith.constant 0 : index
    %c0_18 = arith.constant 0 : index
    %c0_19 = arith.constant 0 : index
    %c0_20 = arith.constant 0 : index
    %8 = vector.load %arg1[%c0_15, %c2_16, %c0_17, %c0_18, %c0_19, %c0_20] : memref<6x3x6x3x1x8xf32, #tpu.memory_space<vmem>>, vector<5x1x5x1x1x8xf32>
    %9 = vector.shape_cast %8 : vector<5x1x5x1x1x8xf32> to vector<5x5x1x8xf32>
    %10 = arith.maximumf %7, %9 : vector<5x5x1x8xf32>
    %c0_21 = arith.constant 0 : index
    %c2_22 = arith.constant 2 : index
    %c0_23 = arith.constant 0 : index
    %c2_24 = arith.constant 2 : index
    %c0_25 = arith.constant 0 : index
    %c0_26 = arith.constant 0 : index
    %11 = vector.load %arg1[%c0_21, %c2_22, %c0_23, %c2_24, %c0_25, %c0_26] : memref<6x3x6x3x1x8xf32, #tpu.memory_space<vmem>>, vector<5x1x5x1x1x8xf32>
    %12 = vector.shape_cast %11 : vector<5x1x5x1x1x8xf32> to vector<5x5x1x8xf32>
    %13 = arith.maximumf %10, %12 : vector<5x5x1x8xf32>
    %c0_27 = arith.constant 0 : index
    %c2_28 = arith.constant 2 : index
    %c1_29 = arith.constant 1 : index
    %c1_30 = arith.constant 1 : index
    %c0_31 = arith.constant 0 : index
    %c0_32 = arith.constant 0 : index
    %14 = vector.load %arg1[%c0_27, %c2_28, %c1_29, %c1_30, %c0_31, %c0_32] : memref<6x3x6x3x1x8xf32, #tpu.memory_space<vmem>>, vector<5x1x5x1x1x8xf32>
    %15 = vector.shape_cast %14 : vector<5x1x5x1x1x8xf32> to vector<5x5x1x8xf32>
    %16 = arith.maximumf %13, %15 : vector<5x5x1x8xf32>
    %c1_33 = arith.constant 1 : index
    %c1_34 = arith.constant 1 : index
    %c0_35 = arith.constant 0 : index
    %c0_36 = arith.constant 0 : index
    %c0_37 = arith.constant 0 : index
    %c0_38 = arith.constant 0 : index
    %17 = vector.load %arg1[%c1_33, %c1_34, %c0_35, %c0_36, %c0_37, %c0_38] : memref<6x3x6x3x1x8xf32, #tpu.memory_space<vmem>>, vector<5x1x5x1x1x8xf32>
    %18 = vector.shape_cast %17 : vector<5x1x5x1x1x8xf32> to vector<5x5x1x8xf32>
    %19 = arith.maximumf %16, %18 : vector<5x5x1x8xf32>
    %c1_39 = arith.constant 1 : index
    %c1_40 = arith.constant 1 : index
    %c0_41 = arith.constant 0 : index
    %c2_42 = arith.constant 2 : index
    %c0_43 = arith.constant 0 : index
    %c0_44 = arith.constant 0 : index
    %20 = vector.load %arg1[%c1_39, %c1_40, %c0_41, %c2_42, %c0_43, %c0_44] : memref<6x3x6x3x1x8xf32, #tpu.memory_space<vmem>>, vector<5x1x5x1x1x8xf32>
    %21 = vector.shape_cast %20 : vector<5x1x5x1x1x8xf32> to vector<5x5x1x8xf32>
    %22 = arith.maximumf %19, %21 : vector<5x5x1x8xf32>
    %c1_45 = arith.constant 1 : index
    %c1_46 = arith.constant 1 : index
    %c1_47 = arith.constant 1 : index
    %c1_48 = arith.constant 1 : index
    %c0_49 = arith.constant 0 : index
    %c0_50 = arith.constant 0 : index
    %23 = vector.load %arg1[%c1_45, %c1_46, %c1_47, %c1_48, %c0_49, %c0_50] : memref<6x3x6x3x1x8xf32, #tpu.memory_space<vmem>>, vector<5x1x5x1x1x8xf32>
    %24 = vector.shape_cast %23 : vector<5x1x5x1x1x8xf32> to vector<5x5x1x8xf32>
    %25 = arith.maximumf %22, %24 : vector<5x5x1x8xf32>
    %c0_51 = arith.constant 0 : index
    %c0_52 = arith.constant 0 : index
    %c0_53 = arith.constant 0 : index
    %c0_54 = arith.constant 0 : index
    %26 = vector.load %arg2[%c0_51, %c0_52, %c0_53, %c0_54] : memref<5x5x1x8xf32, #tpu.memory_space<vmem>>, vector<5x5x1x8xf32>
    tpu.vector_store %arg2[%c0_51, %c0_52, %c0_53, %c0_54], %25 {strides = array<i32>} : memref<5x5x1x8xf32, #tpu.memory_space<vmem>>, vector<5x5x1x8xf32>,
    return
  }
  func.func @transform_0(%arg0: i32) -> (i32, i32, i32, i32, i32, i32) {
    %c0_i32 = arith.constant 0 : i32
    %c0_i32_0 = arith.constant 0 : i32
    %c0_i32_1 = arith.constant 0 : i32
    %c0_i32_2 = arith.constant 0 : i32
    %c0_i32_3 = arith.constant 0 : i32
    %c0_i32_4 = arith.constant 0 : i32
    return %c0_i32, %c0_i32_0, %c0_i32_1, %c0_i32_2, %arg0, %c0_i32_3 : i32, i32, i32, i32, i32, i32
  }
  func.func @transform_1(%arg0: i32) -> (i32, i32, i32, i32) {
    %c0_i32 = arith.constant 0 : i32
    %c0_i32_0 = arith.constant 0 : i32
    %c0_i32_1 = arith.constant 0 : i32
    %c0_i32_2 = arith.constant 0 : i32
    return %c0_i32, %c0_i32_0, %arg0, %c0_i32_1 : i32, i32, i32, i32
  }
}

</mosaic_0001>

<llo_original>
// kernel: tpu_custom_call.1
$region0: #{tpu_custom_call.1}
  #allocation0 [shape = 'u32[]', space=smem, size = 0x4, offset = 0x4, fixed_abs, tag = 'smem constant byte address 0x4 - core index']
  #allocation1 [shape = 'u32[144,128]{1,0:T(1,128)}', space=vmem, size = 0x12000, scoped, tag = 'internal scratch']
  %s0 = inlined_call_operand.hbm [shape: f32[6,3,6,3,1,8], index: 0, kind: input, shape index: {}]
  %s1 = inlined_call_operand.hbm [shape: f32[5,5,1,8], index: 1, kind: output, shape index: {}]
  %s2 = sld [smem:[#allocation0]]
  $region18: #{tpu_custom_call.1} parent=0
    _
  %s4 = ssub.s32 1, %s2
  %s5 = scalar_select 0, %s4, %s2
  $region1: #{tpu_custom_call.1} parent=0
    #allocation2 [shape = 'u8[165888]{0}', space=vmem, size = 0x28800, scoped, tag = 'input window, operand 0, single buffered']
    #allocation3 [shape = 's32[1]{0}', space=sflag, size = 0x4, scoped, tag = 'scoped memory for tpu_custom_call.1']
    #allocation4 [shape = 's32[1]{0}', space=sflag, size = 0x4, scoped, tag = 'scoped memory for tpu_custom_call.1']
    #allocation5 [shape = 'u8[12800]{0}', space=vmem, size = 0x3400, scoped, tag = 'output window, operand 0, single buffered']
    %6 = vsyncpa [#allocation3], 0
    %7 = vsyncpa [#allocation4], 0
    // Predicated region
    $region2: #{tpu_custom_call.1} parent=1 // pred_check
      _
    $region3: #{tpu_custom_call.1} parent=1 // pred_check_branch
      %9 = sbr.rel (0) target = $region5
    $region4: #{tpu_custom_call.1} parent=1 // pred_region
      %s11 = ssub.s32 5184, 5184
      %12 = vsyncadd [#allocation3], %s11
      %s13 = sshll.u32 [#allocation2], 4
      %s14 = int_to_ptr.vmem [resolvable:$true] %s13
      %19 = dma.hbm_to_vmem [thread:$0]  %s0, 5184, %s14, [#allocation3], 16, 16, 1
    $region5: #{tpu_custom_call.1} parent=1 // pred_fallthru
      _
    // Predicated region
    $region6: #{tpu_custom_call.1} parent=1 // pred_check
      _
    $region7: #{tpu_custom_call.1} parent=1 // pred_check_branch
      %21 = sbr.rel (0) target = $region9
    $region8: #{tpu_custom_call.1} parent=1 // pred_region
      %22 = dma.done [#allocation3], 5184
    $region9: #{tpu_custom_call.1} parent=1 // pred_fallthru
      _
    %v23 = vld [vmem:[#allocation2] sm:$0x1]
    %v24 = vld [vmem:[#allocation2 + $0x3] sm:$0x1]
    %v25 = vld [vmem:[#allocation2 + $0x6] sm:$0x1]
    %v26 = vld [vmem:[#allocation2 + $0x9] sm:$0x1]
    %v27 = vld [vmem:[#allocation2 + $0xc] sm:$0x1]
    %v28 = vld [vmem:[#allocation2 + $0x36] sm:$0x1]
    %v29 = vld [vmem:[#allocation2 + $0x39] sm:$0x1]
    %v30 = vld [vmem:[#allocation2 + $0x3c] sm:$0x1]
    %v31 = vld [vmem:[#allocation2 + $0x3f] sm:$0x1]
    %v32 = vld [vmem:[#allocation2 + $0x42] sm:$0x1]
    %v33 = vld [vmem:[#allocation2 + $0x6c] sm:$0x1]
    %v34 = vld [vmem:[#allocation2 + $0x6f] sm:$0x1]
    %v35 = vld [vmem:[#allocation2 + $0x72] sm:$0x1]
    %v36 = vld [vmem:[#allocation2 + $0x75] sm:$0x1]
    %v37 = vld [vmem:[#allocation2 + $0x78] sm:$0x1]
    %v38 = vld [vmem:[#allocation2 + $0xa2] sm:$0x1]
    %v39 = vld [vmem:[#allocation2 + $0xa5] sm:$0x1]
    %v40 = vld [vmem:[#allocation2 + $0xa8] sm:$0x1]
    %v41 = vld [vmem:[#allocation2 + $0xab] sm:$0x1]
    %v42 = vld [vmem:[#allocation2 + $0xae] sm:$0x1]
    %v43 = vld [vmem:[#allocation2 + $0xd8] sm:$0x1]
    %v44 = vld [vmem:[#allocation2 + $0xdb] sm:$0x1]
    %v45 = vld [vmem:[#allocation2 + $0xde] sm:$0x1]
    %v46 = vld [vmem:[#allocation2 + $0xe1] sm:$0x1]
    %v47 = vld [vmem:[#allocation2 + $0xe4] sm:$0x1]
    %s48 = scalar_lea.vmem [#allocation2], 2
    %v49 = vld [vmem:[%s48] sm:$0x1]
    %v50 = vld [vmem:[%s48 + $0x3] sm:$0x1]
    %v51 = vld [vmem:[%s48 + $0x6] sm:$0x1]
    %v52 = vld [vmem:[%s48 + $0x9] sm:$0x1]
    %v53 = vld [vmem:[%s48 + $0xc] sm:$0x1]
    %v54 = vld [vmem:[%s48 + $0x36] sm:$0x1]
    %v55 = vld [vmem:[%s48 + $0x39] sm:$0x1]
    %v56 = vld [vmem:[%s48 + $0x3c] sm:$0x1]
    %v57 = vld [vmem:[%s48 + $0x3f] sm:$0x1]
    %v58 = vld [vmem:[%s48 + $0x42] sm:$0x1]
    %v59 = vld [vmem:[%s48 + $0x6c] sm:$0x1]
    %v60 = vld [vmem:[%s48 + $0x6f] sm:$0x1]
    %v61 = vld [vmem:[%s48 + $0x72] sm:$0x1]
    %v62 = vld [vmem:[%s48 + $0x75] sm:$0x1]
    %v63 = vld [vmem:[%s48 + $0x78] sm:$0x1]
    %v64 = vld [vmem:[%s48 + $0xa2] sm:$0x1]
    %v65 = vld [vmem:[%s48 + $0xa5] sm:$0x1]
    %v66 = vld [vmem:[%s48 + $0xa8] sm:$0x1]
    %v67 = vld [vmem:[%s48 + $0xab] sm:$0x1]
    %v68 = vld [vmem:[%s48 + $0xae] sm:$0x1]
    %v69 = vld [vmem:[%s48 + $0xd8] sm:$0x1]
    %v70 = vld [vmem:[%s48 + $0xdb] sm:$0x1]
    %v71 = vld [vmem:[%s48 + $0xde] sm:$0x1]
    %v72 = vld [vmem:[%s48 + $0xe1] sm:$0x1]
    %v73 = vld [vmem:[%s48 + $0xe4] sm:$0x1]
    %v74 = vmax.f32 %v23, %v49
    %v75 = vmax.f32 %v24, %v50
    %v76 = vmax.f32 %v25, %v51
    %v77 = vmax.f32 %v26, %v52
    %v78 = vmax.f32 %v27, %v53
    %v79 = vmax.f32 %v28, %v54
    %v80 = vmax.f32 %v29, %v55
    %v81 = vmax.f32 %v30, %v56
    %v82 = vmax.f32 %v31, %v57
    %v83 = vmax.f32 %v32, %v58
    %v84 = vmax.f32 %v33, %v59
    %v85 = vmax.f32 %v34, %v60
    %v86 = vmax.f32 %v35, %v61
    %v87 = vmax.f32 %v36, %v62
    %v88 = vmax.f32 %v37, %v63
    %v89 = vmax.f32 %v38, %v64
    %v90 = vmax.f32 %v39, %v65
    %v91 = vmax.f32 %v40, %v66
    %v92 = vmax.f32 %v41, %v67
    %v93 = vmax.f32 %v42, %v68
    %v94 = vmax.f32 %v43, %v69
    %v95 = vmax.f32 %v44, %v70
    %v96 = vmax.f32 %v45, %v71
    %v97 = vmax.f32 %v46, %v72
    %v98 = vmax.f32 %v47, %v73
    %s99 = scalar_lea.vmem [#allocation2], 4
    %v100 = vld [vmem:[%s99] sm:$0x1]
    %v101 = vld [vmem:[%s99 + $0x3] sm:$0x1]
    %v102 = vld [vmem:[%s99 + $0x6] sm:$0x1]
    %v103 = vld [vmem:[%s99 + $0x9] sm:$0x1]
    %v104 = vld [vmem:[%s99 + $0xc] sm:$0x1]
    %v105 = vld [vmem:[%s99 + $0x36] sm:$0x1]
    %v106 = vld [vmem:[%s99 + $0x39] sm:$0x1]
    %v107 = vld [vmem:[%s99 + $0x3c] sm:$0x1]
    %v108 = vld [vmem:[%s99 + $0x3f] sm:$0x1]
    %v109 = vld [vmem:[%s99 + $0x42] sm:$0x1]
    %v110 = vld [vmem:[%s99 + $0x6c] sm:$0x1]
    %v111 = vld [vmem:[%s99 + $0x6f] sm:$0x1]
    %v112 = vld [vmem:[%s99 + $0x72] sm:$0x1]
    %v113 = vld [vmem:[%s99 + $0x75] sm:$0x1]
    %v114 = vld [vmem:[%s99 + $0x78] sm:$0x1]
    %v115 = vld [vmem:[%s99 + $0xa2] sm:$0x1]
    %v116 = vld [vmem:[%s99 + $0xa5] sm:$0x1]
    %v117 = vld [vmem:[%s99 + $0xa8] sm:$0x1]
    %v118 = vld [vmem:[%s99 + $0xab] sm:$0x1]
    %v119 = vld [vmem:[%s99 + $0xae] sm:$0x1]
    %v120 = vld [vmem:[%s99 + $0xd8] sm:$0x1]
    %v121 = vld [vmem:[%s99 + $0xdb] sm:$0x1]
    %v122 = vld [vmem:[%s99 + $0xde] sm:$0x1]
    %v123 = vld [vmem:[%s99 + $0xe1] sm:$0x1]
    %v124 = vld [vmem:[%s99 + $0xe4] sm:$0x1]
    %v125 = vmax.f32 %v74, %v100
    %v126 = vmax.f32 %v75, %v101
    %v127 = vmax.f32 %v76, %v102
    %v128 = vmax.f32 %v77, %v103
    %v129 = vmax.f32 %v78, %v104
    %v130 = vmax.f32 %v79, %v105
    %v131 = vmax.f32 %v80, %v106
    %v132 = vmax.f32 %v81, %v107
    %v133 = vmax.f32 %v82, %v108
    %v134 = vmax.f32 %v83, %v109
    %v135 = vmax.f32 %v84, %v110
    %v136 = vmax.f32 %v85, %v111
    %v137 = vmax.f32 %v86, %v112
    %v138 = vmax.f32 %v87, %v113
    %v139 = vmax.f32 %v88, %v114
    %v140 = vmax.f32 %v89, %v115
    %v141 = vmax.f32 %v90, %v116
    %v142 = vmax.f32 %v91, %v117
    %v143 = vmax.f32 %v92, %v118
    %v144 = vmax.f32 %v93, %v119
    %v145 = vmax.f32 %v94, %v120
    %v146 = vmax.f32 %v95, %v121
    %v147 = vmax.f32 %v96, %v122
    %v148 = vmax.f32 %v97, %v123
    %v149 = vmax.f32 %v98, %v124
    %s150 = scalar_lea.vmem [#allocation2], 36
    %v151 = vld [vmem:[%s150] sm:$0x1]
    %v152 = vld [vmem:[%s150 + $0x3] sm:$0x1]
    %v153 = vld [vmem:[%s150 + $0x6] sm:$0x1]
    %v154 = vld [vmem:[%s150 + $0x9] sm:$0x1]
    %v155 = vld [vmem:[%s150 + $0xc] sm:$0x1]
    %v156 = vld [vmem:[%s150 + $0x36] sm:$0x1]
    %v157 = vld [vmem:[%s150 + $0x39] sm:$0x1]
    %v158 = vld [vmem:[%s150 + $0x3c] sm:$0x1]
    %v159 = vld [vmem:[%s150 + $0x3f] sm:$0x1]
    %v160 = vld [vmem:[%s150 + $0x42] sm:$0x1]
    %v161 = vld [vmem:[%s150 + $0x6c] sm:$0x1]
    %v162 = vld [vmem:[%s150 + $0x6f] sm:$0x1]
    %v163 = vld [vmem:[%s150 + $0x72] sm:$0x1]
    %v164 = vld [vmem:[%s150 + $0x75] sm:$0x1]
    %v165 = vld [vmem:[%s150 + $0x78] sm:$0x1]
    %v166 = vld [vmem:[%s150 + $0xa2] sm:$0x1]
    %v167 = vld [vmem:[%s150 + $0xa5] sm:$0x1]
    %v168 = vld [vmem:[%s150 + $0xa8] sm:$0x1]
    %v169 = vld [vmem:[%s150 + $0xab] sm:$0x1]
    %v170 = vld [vmem:[%s150 + $0xae] sm:$0x1]
    %v171 = vld [vmem:[%s150 + $0xd8] sm:$0x1]
    %v172 = vld [vmem:[%s150 + $0xdb] sm:$0x1]
    %v173 = vld [vmem:[%s150 + $0xde] sm:$0x1]
    %v174 = vld [vmem:[%s150 + $0xe1] sm:$0x1]
    %v175 = vld [vmem:[%s150 + $0xe4] sm:$0x1]
    %v176 = vmax.f32 %v125, %v151
    %v177 = vmax.f32 %v126, %v152
    %v178 = vmax.f32 %v127, %v153
    %v179 = vmax.f32 %v128, %v154
    %v180 = vmax.f32 %v129, %v155
    %v181 = vmax.f32 %v130, %v156
    %v182 = vmax.f32 %v131, %v157
    %v183 = vmax.f32 %v132, %v158
    %v184 = vmax.f32 %v133, %v159
    %v185 = vmax.f32 %v134, %v160
    %v186 = vmax.f32 %v135, %v161
    %v187 = vmax.f32 %v136, %v162
    %v188 = vmax.f32 %v137, %v163
    %v189 = vmax.f32 %v138, %v164
    %v190 = vmax.f32 %v139, %v165
    %v191 = vmax.f32 %v140, %v166
    %v192 = vmax.f32 %v141, %v167
    %v193 = vmax.f32 %v142, %v168
    %v194 = vmax.f32 %v143, %v169
    %v195 = vmax.f32 %v144, %v170
    %v196 = vmax.f32 %v145, %v171
    %v197 = vmax.f32 %v146, %v172
    %v198 = vmax.f32 %v147, %v173
    %v199 = vmax.f32 %v148, %v174
    %v200 = vmax.f32 %v149, %v175
    %s201 = scalar_lea.vmem [#allocation2], 38
    %v202 = vld [vmem:[%s201] sm:$0x1]
    %v203 = vld [vmem:[%s201 + $0x3] sm:$0x1]
    %v204 = vld [vmem:[%s201 + $0x6] sm:$0x1]
    %v205 = vld [vmem:[%s201 + $0x9] sm:$0x1]
    %v206 = vld [vmem:[%s201 + $0xc] sm:$0x1]
    %v207 = vld [vmem:[%s201 + $0x36] sm:$0x1]
    %v208 = vld [vmem:[%s201 + $0x39] sm:$0x1]
    %v209 = vld [vmem:[%s201 + $0x3c] sm:$0x1]
    %v210 = vld [vmem:[%s201 + $0x3f] sm:$0x1]
    %v211 = vld [vmem:[%s201 + $0x42] sm:$0x1]
    %v212 = vld [vmem:[%s201 + $0x6c] sm:$0x1]
    %v213 = vld [vmem:[%s201 + $0x6f] sm:$0x1]
    %v214 = vld [vmem:[%s201 + $0x72] sm:$0x1]
    %v215 = vld [vmem:[%s201 + $0x75] sm:$0x1]
    %v216 = vld [vmem:[%s201 + $0x78] sm:$0x1]
    %v217 = vld [vmem:[%s201 + $0xa2] sm:$0x1]
    %v218 = vld [vmem:[%s201 + $0xa5] sm:$0x1]
    %v219 = vld [vmem:[%s201 + $0xa8] sm:$0x1]
    %v220 = vld [vmem:[%s201 + $0xab] sm:$0x1]
    %v221 = vld [vmem:[%s201 + $0xae] sm:$0x1]
    %v222 = vld [vmem:[%s201 + $0xd8] sm:$0x1]
    %v223 = vld [vmem:[%s201 + $0xdb] sm:$0x1]
    %v224 = vld [vmem:[%s201 + $0xde] sm:$0x1]
    %v225 = vld [vmem:[%s201 + $0xe1] sm:$0x1]
    %v226 = vld [vmem:[%s201 + $0xe4] sm:$0x1]
    %v227 = vmax.f32 %v176, %v202
    %v228 = vmax.f32 %v177, %v203
    %v229 = vmax.f32 %v178, %v204
    %v230 = vmax.f32 %v179, %v205
    %v231 = vmax.f32 %v180, %v206
    %v232 = vmax.f32 %v181, %v207
    %v233 = vmax.f32 %v182, %v208
    %v234 = vmax.f32 %v183, %v209
    %v235 = vmax.f32 %v184, %v210
    %v236 = vmax.f32 %v185, %v211
    %v237 = vmax.f32 %v186, %v212
    %v238 = vmax.f32 %v187, %v213
    %v239 = vmax.f32 %v188, %v214
    %v240 = vmax.f32 %v189, %v215
    %v241 = vmax.f32 %v190, %v216
    %v242 = vmax.f32 %v191, %v217
    %v243 = vmax.f32 %v192, %v218
    %v244 = vmax.f32 %v193, %v219
    %v245 = vmax.f32 %v194, %v220
    %v246 = vmax.f32 %v195, %v221
    %v247 = vmax.f32 %v196, %v222
    %v248 = vmax.f32 %v197, %v223
    %v249 = vmax.f32 %v198, %v224
    %v250 = vmax.f32 %v199, %v225
    %v251 = vmax.f32 %v200, %v226
    %s252 = scalar_lea.vmem [#allocation2], 40
    %v253 = vld [vmem:[%s252] sm:$0x1]
    %v254 = vld [vmem:[%s252 + $0x3] sm:$0x1]
    %v255 = vld [vmem:[%s252 + $0x6] sm:$0x1]
    %v256 = vld [vmem:[%s252 + $0x9] sm:$0x1]
    %v257 = vld [vmem:[%s252 + $0xc] sm:$0x1]
    %v258 = vld [vmem:[%s252 + $0x36] sm:$0x1]
    %v259 = vld [vmem:[%s252 + $0x39] sm:$0x1]
    %v260 = vld [vmem:[%s252 + $0x3c] sm:$0x1]
    %v261 = vld [vmem:[%s252 + $0x3f] sm:$0x1]
    %v262 = vld [vmem:[%s252 + $0x42] sm:$0x1]
    %v263 = vld [vmem:[%s252 + $0x6c] sm:$0x1]
    %v264 = vld [vmem:[%s252 + $0x6f] sm:$0x1]
    %v265 = vld [vmem:[%s252 + $0x72] sm:$0x1]
    %v266 = vld [vmem:[%s252 + $0x75] sm:$0x1]
    %v267 = vld [vmem:[%s252 + $0x78] sm:$0x1]
    %v268 = vld [vmem:[%s252 + $0xa2] sm:$0x1]
    %v269 = vld [vmem:[%s252 + $0xa5] sm:$0x1]
    %v270 = vld [vmem:[%s252 + $0xa8] sm:$0x1]
    %v271 = vld [vmem:[%s252 + $0xab] sm:$0x1]
    %v272 = vld [vmem:[%s252 + $0xae] sm:$0x1]
    %v273 = vld [vmem:[%s252 + $0xd8] sm:$0x1]
    %v274 = vld [vmem:[%s252 + $0xdb] sm:$0x1]
    %v275 = vld [vmem:[%s252 + $0xde] sm:$0x1]
    %v276 = vld [vmem:[%s252 + $0xe1] sm:$0x1]
    %v277 = vld [vmem:[%s252 + $0xe4] sm:$0x1]
    %v278 = vmax.f32 %v227, %v253
    %v279 = vmax.f32 %v228, %v254
    %v280 = vmax.f32 %v229, %v255
    %v281 = vmax.f32 %v230, %v256
    %v282 = vmax.f32 %v231, %v257
    %v283 = vmax.f32 %v232, %v258
    %v284 = vmax.f32 %v233, %v259
    %v285 = vmax.f32 %v234, %v260
    %v286 = vmax.f32 %v235, %v261
    %v287 = vmax.f32 %v236, %v262
    %v288 = vmax.f32 %v237, %v263
    %v289 = vmax.f32 %v238, %v264
    %v290 = vmax.f32 %v239, %v265
    %v291 = vmax.f32 %v240, %v266
    %v292 = vmax.f32 %v241, %v267
    %v293 = vmax.f32 %v242, %v268
    %v294 = vmax.f32 %v243, %v269
    %v295 = vmax.f32 %v244, %v270
    %v296 = vmax.f32 %v245, %v271
    %v297 = vmax.f32 %v246, %v272
    %v298 = vmax.f32 %v247, %v273
    %v299 = vmax.f32 %v248, %v274
    %v300 = vmax.f32 %v249, %v275
    %v301 = vmax.f32 %v250, %v276
    %v302 = vmax.f32 %v251, %v277
    %s303 = scalar_lea.vmem [#allocation2], 72
    %v304 = vld [vmem:[%s303] sm:$0x1]
    %v305 = vld [vmem:[%s303 + $0x3] sm:$0x1]
    %v306 = vld [vmem:[%s303 + $0x6] sm:$0x1]
    %v307 = vld [vmem:[%s303 + $0x9] sm:$0x1]
    %v308 = vld [vmem:[%s303 + $0xc] sm:$0x1]
    %v309 = vld [vmem:[%s303 + $0x36] sm:$0x1]
    %v310 = vld [vmem:[%s303 + $0x39] sm:$0x1]
    %v311 = vld [vmem:[%s303 + $0x3c] sm:$0x1]
    %v312 = vld [vmem:[%s303 + $0x3f] sm:$0x1]
    %v313 = vld [vmem:[%s303 + $0x42] sm:$0x1]
    %v314 = vld [vmem:[%s303 + $0x6c] sm:$0x1]
    %v315 = vld [vmem:[%s303 + $0x6f] sm:$0x1]
    %v316 = vld [vmem:[%s303 + $0x72] sm:$0x1]
    %v317 = vld [vmem:[%s303 + $0x75] sm:$0x1]
    %v318 = vld [vmem:[%s303 + $0x78] sm:$0x1]
    %v319 = vld [vmem:[%s303 + $0xa2] sm:$0x1]
    %v320 = vld [vmem:[%s303 + $0xa5] sm:$0x1]
    %v321 = vld [vmem:[%s303 + $0xa8] sm:$0x1]
    %v322 = vld [vmem:[%s303 + $0xab] sm:$0x1]
    %v323 = vld [vmem:[%s303 + $0xae] sm:$0x1]
    %v324 = vld [vmem:[%s303 + $0xd8] sm:$0x1]
    %v325 = vld [vmem:[%s303 + $0xdb] sm:$0x1]
    %v326 = vld [vmem:[%s303 + $0xde] sm:$0x1]
    %v327 = vld [vmem:[%s303 + $0xe1] sm:$0x1]
    %v328 = vld [vmem:[%s303 + $0xe4] sm:$0x1]
    %v329 = vmax.f32 %v278, %v304
    %v330 = vmax.f32 %v279, %v305
    %v331 = vmax.f32 %v280, %v306
    %v332 = vmax.f32 %v281, %v307
    %v333 = vmax.f32 %v282, %v308
    %v334 = vmax.f32 %v283, %v309
    %v335 = vmax.f32 %v284, %v310
    %v336 = vmax.f32 %v285, %v311
    %v337 = vmax.f32 %v286, %v312
    %v338 = vmax.f32 %v287, %v313
    %v339 = vmax.f32 %v288, %v314
    %v340 = vmax.f32 %v289, %v315
    %v341 = vmax.f32 %v290, %v316
    %v342 = vmax.f32 %v291, %v317
    %v343 = vmax.f32 %v292, %v318
    %v344 = vmax.f32 %v293, %v319
    %v345 = vmax.f32 %v294, %v320
    %v346 = vmax.f32 %v295, %v321
    %v347 = vmax.f32 %v296, %v322
    %v348 = vmax.f32 %v297, %v323
    %v349 = vmax.f32 %v298, %v324
    %v350 = vmax.f32 %v299, %v325
    %v351 = vmax.f32 %v300, %v326
    %v352 = vmax.f32 %v301, %v327
    %v353 = vmax.f32 %v302, %v328
    %s354 = scalar_lea.vmem [#allocation2], 74
    %v355 = vld [vmem:[%s354] sm:$0x1]
    %v356 = vld [vmem:[%s354 + $0x3] sm:$0x1]
    %v357 = vld [vmem:[%s354 + $0x6] sm:$0x1]
    %v358 = vld [vmem:[%s354 + $0x9] sm:$0x1]
    %v359 = vld [vmem:[%s354 + $0xc] sm:$0x1]
    %v360 = vld [vmem:[%s354 + $0x36] sm:$0x1]
    %v361 = vld [vmem:[%s354 + $0x39] sm:$0x1]
    %v362 = vld [vmem:[%s354 + $0x3c] sm:$0x1]
    %v363 = vld [vmem:[%s354 + $0x3f] sm:$0x1]
    %v364 = vld [vmem:[%s354 + $0x42] sm:$0x1]
    %v365 = vld [vmem:[%s354 + $0x6c] sm:$0x1]
    %v366 = vld [vmem:[%s354 + $0x6f] sm:$0x1]
    %v367 = vld [vmem:[%s354 + $0x72] sm:$0x1]
    %v368 = vld [vmem:[%s354 + $0x75] sm:$0x1]
    %v369 = vld [vmem:[%s354 + $0x78] sm:$0x1]
    %v370 = vld [vmem:[%s354 + $0xa2] sm:$0x1]
    %v371 = vld [vmem:[%s354 + $0xa5] sm:$0x1]
    %v372 = vld [vmem:[%s354 + $0xa8] sm:$0x1]
    %v373 = vld [vmem:[%s354 + $0xab] sm:$0x1]
    %v374 = vld [vmem:[%s354 + $0xae] sm:$0x1]
    %v375 = vld [vmem:[%s354 + $0xd8] sm:$0x1]
    %v376 = vld [vmem:[%s354 + $0xdb] sm:$0x1]
    %v377 = vld [vmem:[%s354 + $0xde] sm:$0x1]
    %v378 = vld [vmem:[%s354 + $0xe1] sm:$0x1]
    %v379 = vld [vmem:[%s354 + $0xe4] sm:$0x1]
    %v380 = vmax.f32 %v329, %v355
    %v381 = vmax.f32 %v330, %v356
    %v382 = vmax.f32 %v331, %v357
    %v383 = vmax.f32 %v332, %v358
    %v384 = vmax.f32 %v333, %v359
    %v385 = vmax.f32 %v334, %v360
    %v386 = vmax.f32 %v335, %v361
    %v387 = vmax.f32 %v336, %v362
    %v388 = vmax.f32 %v337, %v363
    %v389 = vmax.f32 %v338, %v364
    %v390 = vmax.f32 %v339, %v365
    %v391 = vmax.f32 %v340, %v366
    %v392 = vmax.f32 %v341, %v367
    %v393 = vmax.f32 %v342, %v368
    %v394 = vmax.f32 %v343, %v369
    %v395 = vmax.f32 %v344, %v370
    %v396 = vmax.f32 %v345, %v371
    %v397 = vmax.f32 %v346, %v372
    %v398 = vmax.f32 %v347, %v373
    %v399 = vmax.f32 %v348, %v374
    %v400 = vmax.f32 %v349, %v375
    %v401 = vmax.f32 %v350, %v376
    %v402 = vmax.f32 %v351, %v377
    %v403 = vmax.f32 %v352, %v378
    %v404 = vmax.f32 %v353, %v379
    %s405 = scalar_lea.vmem [#allocation2], 76
    %v406 = vld [vmem:[%s405] sm:$0x1]
    %v407 = vld [vmem:[%s405 + $0x3] sm:$0x1]
    %v408 = vld [vmem:[%s405 + $0x6] sm:$0x1]
    %v409 = vld [vmem:[%s405 + $0x9] sm:$0x1]
    %v410 = vld [vmem:[%s405 + $0xc] sm:$0x1]
    %v411 = vld [vmem:[%s405 + $0x36] sm:$0x1]
    %v412 = vld [vmem:[%s405 + $0x39] sm:$0x1]
    %v413 = vld [vmem:[%s405 + $0x3c] sm:$0x1]
    %v414 = vld [vmem:[%s405 + $0x3f] sm:$0x1]
    %v415 = vld [vmem:[%s405 + $0x42] sm:$0x1]
    %v416 = vld [vmem:[%s405 + $0x6c] sm:$0x1]
    %v417 = vld [vmem:[%s405 + $0x6f] sm:$0x1]
    %v418 = vld [vmem:[%s405 + $0x72] sm:$0x1]
    %v419 = vld [vmem:[%s405 + $0x75] sm:$0x1]
    %v420 = vld [vmem:[%s405 + $0x78] sm:$0x1]
    %v421 = vld [vmem:[%s405 + $0xa2] sm:$0x1]
    %v422 = vld [vmem:[%s405 + $0xa5] sm:$0x1]
    %v423 = vld [vmem:[%s405 + $0xa8] sm:$0x1]
    %v424 = vld [vmem:[%s405 + $0xab] sm:$0x1]
    %v425 = vld [vmem:[%s405 + $0xae] sm:$0x1]
    %v426 = vld [vmem:[%s405 + $0xd8] sm:$0x1]
    %v427 = vld [vmem:[%s405 + $0xdb] sm:$0x1]
    %v428 = vld [vmem:[%s405 + $0xde] sm:$0x1]
    %v429 = vld [vmem:[%s405 + $0xe1] sm:$0x1]
    %v430 = vld [vmem:[%s405 + $0xe4] sm:$0x1]
    %v431 = vmax.f32 %v380, %v406
    %v432 = vmax.f32 %v381, %v407
    %v433 = vmax.f32 %v382, %v408
    %v434 = vmax.f32 %v383, %v409
    %v435 = vmax.f32 %v384, %v410
    %v436 = vmax.f32 %v385, %v411
    %v437 = vmax.f32 %v386, %v412
    %v438 = vmax.f32 %v387, %v413
    %v439 = vmax.f32 %v388, %v414
    %v440 = vmax.f32 %v389, %v415
    %v441 = vmax.f32 %v390, %v416
    %v442 = vmax.f32 %v391, %v417
    %v443 = vmax.f32 %v392, %v418
    %v444 = vmax.f32 %v393, %v419
    %v445 = vmax.f32 %v394, %v420
    %v446 = vmax.f32 %v395, %v421
    %v447 = vmax.f32 %v396, %v422
    %v448 = vmax.f32 %v397, %v423
    %v449 = vmax.f32 %v398, %v424
    %v450 = vmax.f32 %v399, %v425
    %v451 = vmax.f32 %v400, %v426
    %v452 = vmax.f32 %v401, %v427
    %v453 = vmax.f32 %v402, %v428
    %v454 = vmax.f32 %v403, %v429
    %v455 = vmax.f32 %v404, %v430
    %vm456 = vcmask 57344
    %457 = vst.msk [vmem:[#allocation5] sm:$0x1] %vm456, %v431
    %458 = vst.msk [vmem:[#allocation5 + $0x1] sm:$0x1] %vm456, %v432
    %459 = vst.msk [vmem:[#allocation5 + $0x2] sm:$0x1] %vm456, %v433
    %460 = vst.msk [vmem:[#allocation5 + $0x3] sm:$0x1] %vm456, %v434
    %461 = vst.msk [vmem:[#allocation5 + $0x4] sm:$0x1] %vm456, %v435
    %462 = vst.msk [vmem:[#allocation5 + $0x5] sm:$0x1] %vm456, %v436
    %463 = vst.msk [vmem:[#allocation5 + $0x6] sm:$0x1] %vm456, %v437
    %464 = vst.msk [vmem:[#allocation5 + $0x7] sm:$0x1] %vm456, %v438
    %465 = vst.msk [vmem:[#allocation5 + $0x8] sm:$0x1] %vm456, %v439
    %466 = vst.msk [vmem:[#allocation5 + $0x9] sm:$0x1] %vm456, %v440
    %467 = vst.msk [vmem:[#allocation5 + $0xa] sm:$0x1] %vm456, %v441
    %468 = vst.msk [vmem:[#allocation5 + $0xb] sm:$0x1] %vm456, %v442
    %469 = vst.msk [vmem:[#allocation5 + $0xc] sm:$0x1] %vm456, %v443
    %470 = vst.msk [vmem:[#allocation5 + $0xd] sm:$0x1] %vm456, %v444
    %471 = vst.msk [vmem:[#allocation5 + $0xe] sm:$0x1] %vm456, %v445
    %472 = vst.msk [vmem:[#allocation5 + $0xf] sm:$0x1] %vm456, %v446
    %473 = vst.msk [vmem:[#allocation5 + $0x10] sm:$0x1] %vm456, %v447
    %474 = vst.msk [vmem:[#allocation5 + $0x11] sm:$0x1] %vm456, %v448
    %475 = vst.msk [vmem:[#allocation5 + $0x12] sm:$0x1] %vm456, %v449
    %476 = vst.msk [vmem:[#allocation5 + $0x13] sm:$0x1] %vm456, %v450
    %477 = vst.msk [vmem:[#allocation5 + $0x14] sm:$0x1] %vm456, %v451
    %478 = vst.msk [vmem:[#allocation5 + $0x15] sm:$0x1] %vm456, %v452
    %479 = vst.msk [vmem:[#allocation5 + $0x16] sm:$0x1] %vm456, %v453
    %480 = vst.msk [vmem:[#allocation5 + $0x17] sm:$0x1] %vm456, %v454
    %481 = vst.msk [vmem:[#allocation5 + $0x18] sm:$0x1] %vm456, %v455
    // Predicated region
    $region10: #{tpu_custom_call.1} parent=1 // pred_check
      _
    $region11: #{tpu_custom_call.1} parent=1 // pred_check_branch
      %483 = sbr.rel (0) target = $region13
    $region12: #{tpu_custom_call.1} parent=1 // pred_region
      %s485 = ssub.s32 400, 400
      %486 = vsyncadd [#allocation4], %s485
      %s487 = sshll.u32 [#allocation5], 4
      %s488 = int_to_ptr.vmem [resolvable:$true] %s487
      %493 = dma.vmem_to_hbm [thread:$0]  %s488, 400, %s1, [#allocation4], 16, 16, 1
    $region13: #{tpu_custom_call.1} parent=1 // pred_fallthru
      _
    // Predicated region
    $region14: #{tpu_custom_call.1} parent=1 // pred_check
      _
    $region15: #{tpu_custom_call.1} parent=1 // pred_check_branch
      %495 = sbr.rel (0) target = $region17
    $region16: #{tpu_custom_call.1} parent=1 // pred_region
      %496 = dma.done [#allocation4], 400
    $region17: #{tpu_custom_call.1} parent=1 // pred_fallthru
      _
    %497 = vsyncpa [#allocation3], 1
    %498 = vsyncpa [#allocation4], 1

</llo_original>
